<compile_context>
chip_gen: v7x
topology: tpu7x:2x2x1
jax: 0.10.0
libtpu: 0.0.40
codegen_flags: <defaults>
</compile_context>

<pallas_src>
import functools
import math

import jax
import jax.numpy as jnp
from jax import lax
from jax.experimental import pallas as pl
from jax.experimental.pallas import tpu as pltpu


def _attention_kernel(q_ref, k_ref, v_ref, x_ref, o_ref,
                      m_ref, l_ref, acc_ref, *, bf16_softmax):
    ki = pl.program_id(2)

    @pl.when(ki == 0)
    def _init():
        m_ref[...] = jnp.full_like(m_ref, -jnp.inf)
        l_ref[...] = jnp.zeros_like(l_ref)
        acc_ref[...] = jnp.zeros_like(acc_ref)

    q = q_ref[...]                              # (A, tq)  bf16, pre-scaled by 1/sqrt(N)
    k = k_ref[...]                              # (A, tkv) bf16

    # scores^T[m, n] = sum_a k[a, m] * q[a, n] -> (tkv, tq), f32 accumulation.
    s_t = lax.dot_general(k, q, (((0,), (0,)), ((), ())),
                          preferred_element_type=jnp.float32)

    m_prev = m_ref[...]                                           # (1, tq) f32
    m_new = jnp.maximum(m_prev, jnp.max(s_t, axis=0, keepdims=True))
    alpha = jnp.exp(m_prev - m_new)                               # (1, tq) f32

    if bf16_softmax:
        # bf16 subtract + exp on the big (tkv, tq) tile (v6e/v7x VPU/EUP are bf16).
        p = jnp.exp(s_t.astype(jnp.bfloat16) - m_new.astype(jnp.bfloat16))
    else:
        p = jnp.exp(s_t - m_new)                                  # f32 path (v5e etc.)

    # Stats and accumulation stay in f32.
    l_ref[...] = alpha * l_ref[...] + jnp.sum(p, axis=0, keepdims=True,
                                              dtype=jnp.float32)
    acc_ref[...] = alpha * acc_ref[...] + jnp.dot(
        v_ref[...], p.astype(jnp.bfloat16),
        preferred_element_type=jnp.float32)                       # (C, tq)
    m_ref[...] = m_new

    @pl.when(ki == pl.num_programs(2) - 1)
    def _finalize():
        inv_l = pl.reciprocal(l_ref[...], approx=True)            # (1, tq), EUP slot
        o_ref[...] = (acc_ref[...] * inv_l
                      + x_ref[...].astype(jnp.float32)).astype(o_ref.dtype)


def _pick_tile(n, cap):
    """Largest 128-multiple divisor of n that is <= cap; falls back to the full dim."""
    best = 0
    t = 128
    while t <= min(cap, n):
        if n % t == 0:
            best = t
        t += 128
    if best:
        return best
    # No 128-multiple divisor <= cap: full dim is the only always-legal block.
    # TODO(synk): pad N to a multiple of 128 + mask instead, to avoid a monolithic
    # block when N is large and not divisible by 128.
    return n


def _device_flags():
    try:
        kind = jax.devices()[0].device_kind.lower()
    except Exception:
        kind = ""
    has_bf16_vpu = ("v6" in kind) or ("v7" in kind)
    is_v7 = "v7" in kind
    return has_bf16_vpu, is_v7


def attention_pallas(x_nchw, wq, bq, wk, bk, wv, bv, *,
                     tq=None, tkv=None, bf16_softmax=None):
    """Forward pass of the PyTorch `attention` module.

    x_nchw : (B, C, H, W)
    wq, wk : (A, C)  conv1x1 weights in PyTorch (out, in) layout (kernel dims squeezed)
    wv     : (C, C)
    bq, bk : (A,) ; bv : (C,)
    """
    B, C, H, W = x_nchw.shape
    N = H * W
    A = wq.shape[0]

    has_bf16_vpu, is_v7 = _device_flags()
    if bf16_softmax is None:
        bf16_softmax = has_bf16_vpu

    x = x_nchw.reshape(B, C, N)      # pure reshape: N stays minor (lane) axis

    if tq is None:
        tq = _pick_tile(N, 512)
        # v7x megacore: keep B * (N // tq) >= 2 so both TensorCores get work.
        if is_v7 and B * (N // tq) < 2:
            smaller = _pick_tile(N, max(128, tq // 2))
            if smaller < tq and N % smaller == 0:
                tq = smaller
    if tkv is None:
        tkv = _pick_tile(N, 1024 if is_v7 else 2048)
    assert N % tq == 0 and N % tkv == 0, (N, tq, tkv)

    # Hoist the 1x1-conv projections out of the kernel: tiny einsums, done once per
    # image. Fold the softmax scale into q and pre-cast operands to bf16 (MXU-native).
    scale = 1.0 / math.sqrt(float(N))
    xf = x.astype(jnp.float32)
    q = ((jnp.einsum('ac,bcn->ban', wq, xf) + bq.reshape(1, A, 1)) * scale
         ).astype(jnp.bfloat16)                                   # (B, A, N)
    k = (jnp.einsum('ac,bcn->ban', wk, xf) + bk.reshape(1, A, 1)
         ).astype(jnp.bfloat16)                                   # (B, A, N)
    v = (jnp.einsum('oc,bcn->bon', wv, xf) + bv.reshape(1, C, 1)
         ).astype(jnp.bfloat16)                                   # (B, C, N)

    kernel = functools.partial(_attention_kernel, bf16_softmax=bf16_softmax)
    vmem_limit = (32 if is_v7 else 64) * 1024 * 1024

    out = pl.pallas_call(
        kernel,
        out_shape=jax.ShapeDtypeStruct((B, C, N), x.dtype),
        grid_spec=pltpu.PrefetchScalarGridSpec(
            num_scalar_prefetch=0,
            grid=(B, N // tq, N // tkv),
            in_specs=[
                pl.BlockSpec((None, A, tq), lambda b, qi, ki: (b, 0, qi)),   # q tile
                pl.BlockSpec((None, A, tkv), lambda b, qi, ki: (b, 0, ki)),  # k tile
                pl.BlockSpec((None, C, tkv), lambda b, qi, ki: (b, 0, ki)),  # v tile
                pl.BlockSpec((None, C, tq), lambda b, qi, ki: (b, 0, qi)),   # x (residual)
            ],
            out_specs=pl.BlockSpec((None, C, tq), lambda b, qi, ki: (b, 0, qi)),
            scratch_shapes=[
                pltpu.VMEM((1, tq), jnp.float32),   # m: running row max
                pltpu.VMEM((1, tq), jnp.float32),   # l: running softmax denom
                pltpu.VMEM((C, tq), jnp.float32),   # acc: unnormalized output
            ],
        ),
        compiler_params=pltpu.CompilerParams(
            dimension_semantics=("parallel", "parallel", "arbitrary"),
            vmem_limit_bytes=vmem_limit,
        ),
    )(q, k, v, x)

    return out.reshape(B, C, H, W)


def attention_reference(x_nchw, wq, bq, wk, bk, wv, bv):
    """Pure-JAX reference mirroring the PyTorch forward exactly (f32 throughout)."""
    B, C, H, W = x_nchw.shape
    N = H * W
    x = x_nchw.reshape(B, C, N)                                   # (B, C, N)
    q = jnp.einsum('oc,bcn->bon', wq, x) + bq.reshape(1, -1, 1)   # (B, A, N)
    k = jnp.einsum('oc,bcn->bon', wk, x) + bk.reshape(1, -1, 1)   # (B, A, N)
    v = jnp.einsum('oc,bcn->bon', wv, x) + bv.reshape(1, -1, 1)   # (B, C, N)
    scores = jnp.einsum('ban,bam->bnm', q, k) / math.sqrt(float(N))
    attn = jax.nn.softmax(scores, axis=-1)                        # (B, N, N)
    out = jnp.einsum('bcm,bnm->bcn', v, attn)                     # (B, C, N)
    return (out + x).reshape(B, C, H, W)


if __name__ == "__main__":
    key = jax.random.PRNGKey(0)
    B, C, H, W = 2, 4, 16, 16
    A = 8  # attention_size

    ks = jax.random.split(key, 7)
    x = jax.random.normal(ks[0], (B, C, H, W), dtype=jnp.float32)
    # Conv2d(in, out, 1) weight is (out, in, 1, 1); we pass the squeezed (out, in) matrices.
    wq = jax.random.normal(ks[1], (A, C), dtype=jnp.float32) * 0.1
    bq = jax.random.normal(ks[2], (A,), dtype=jnp.float32) * 0.1
    wk = jax.random.normal(ks[3], (A, C), dtype=jnp.float32) * 0.1
    bk = jax.random.normal(ks[4], (A,), dtype=jnp.float32) * 0.1
    wv = jax.random.normal(ks[5], (C, C), dtype=jnp.float32) * 0.1
    bv = jax.random.normal(ks[6], (C,), dtype=jnp.float32) * 0.1

    ref = attention_reference(x, wq, bq, wk, bk, wv, bv)

    # Default tiles (single KV tile for N=256) and explicit small tiles that exercise the
    # multi-tile online-softmax path (grid = (2, 2, 2)).
    out_default = jax.block_until_ready(attention_pallas(x, wq, bq, wk, bk, wv, bv))
    out_tiled = jax.block_until_ready(
        attention_pallas(x, wq, bq, wk, bk, wv, bv, tq=128, tkv=128))

    assert out_default.shape == (B, C, H, W)
    # bf16 matmul operands / bf16 exp path (f32 stats) + approx reciprocal -> loosened tol.
    assert jnp.allclose(out_default, ref, atol=1e-2, rtol=1e-2), "default-tile mismatch"
    assert jnp.allclose(out_tiled, ref, atol=1e-2, rtol=1e-2), "tiled mismatch"

    print("KERNEL_OK")
</pallas_src>

<mosaic_0001>
module attributes {stable_mosaic.version = 11 : i64} {
  func.func @_attention_kernel(%arg0: i32, %arg1: i32, %arg2: i32, %arg3: memref<1x8x256xbf16, #tpu.memory_space<vmem>>, %arg4: memref<1x8x256xbf16, #tpu.memory_space<vmem>>, %arg5: memref<1x4x256xbf16, #tpu.memory_space<vmem>>, %arg6: memref<1x4x256xf32, #tpu.memory_space<vmem>>, %arg7: memref<1x4x256xf32, #tpu.memory_space<vmem>>, %arg8: memref<1x256xf32, #tpu.memory_space<vmem>>, %arg9: memref<1x256xf32, #tpu.memory_space<vmem>>, %arg10: memref<4x256xf32, #tpu.memory_space<vmem>>) attributes {dimension_semantics = [#tpu.dimension_semantics<parallel>, #tpu.dimension_semantics<parallel>, #tpu.dimension_semantics<arbitrary>], iteration_bounds = array<i64: 2, 1, 1>, scalar_prefetch = 0 : i64, scratch_operands = 3 : i64, tpu.core_type = #tpu.core_type<tc>, window_params = [{transform_indices = @transform_0, window_bounds = array<i64: 1, 8, 256>}, {transform_indices = @transform_1, window_bounds = array<i64: 1, 8, 256>}, {transform_indices = @transform_2, window_bounds = array<i64: 1, 4, 256>}, {transform_indices = @transform_3, window_bounds = array<i64: 1, 4, 256>}, {transform_indices = @transform_4, window_bounds = array<i64: 1, 4, 256>}]} {
    %c0_i32 = arith.constant 0 : i32
    %0 = arith.cmpi eq, %arg2, %c0_i32 : i32
    %1 = arith.extui %0 : i1 to i32
    %c0_i32_0 = arith.constant 0 : i32
    %2 = arith.cmpi ne, %1, %c0_i32_0 : i32
    scf.if %2 {
      %cst_26 = arith.constant 0xFF800000 : f32
      %36 = vector.broadcast %cst_26 : f32 to vector<1x256xf32>
      %c0_27 = arith.constant 0 : index
      %c0_28 = arith.constant 0 : index
      %37 = vector.load %arg8[%c0_27, %c0_28] : memref<1x256xf32, #tpu.memory_space<vmem>>, vector<1x256xf32>
      tpu.vector_store %arg8[%c0_27, %c0_28], %36 {strides = array<i32>} : memref<1x256xf32, #tpu.memory_space<vmem>>, vector<1x256xf32>,
      %cst_29 = arith.constant 0.000000e+00 : f32
      %38 = vector.broadcast %cst_29 : f32 to vector<1x256xf32>
      %c0_30 = arith.constant 0 : index
      %c0_31 = arith.constant 0 : index
      %39 = vector.load %arg9[%c0_30, %c0_31] : memref<1x256xf32, #tpu.memory_space<vmem>>, vector<1x256xf32>
      tpu.vector_store %arg9[%c0_30, %c0_31], %38 {strides = array<i32>} : memref<1x256xf32, #tpu.memory_space<vmem>>, vector<1x256xf32>,
      %cst_32 = arith.constant 0.000000e+00 : f32
      %40 = vector.broadcast %cst_32 : f32 to vector<4x256xf32>
      %c0_33 = arith.constant 0 : index
      %c0_34 = arith.constant 0 : index
      %41 = vector.load %arg10[%c0_33, %c0_34] : memref<4x256xf32, #tpu.memory_space<vmem>>, vector<4x256xf32>
      tpu.vector_store %arg10[%c0_33, %c0_34], %40 {strides = array<i32>} : memref<4x256xf32, #tpu.memory_space<vmem>>, vector<4x256xf32>,
    } else {
    }
    %c0 = arith.constant 0 : index
    %c0_1 = arith.constant 0 : index
    %c0_2 = arith.constant 0 : index
    %3 = vector.load %arg3[%c0, %c0_1, %c0_2] : memref<1x8x256xbf16, #tpu.memory_space<vmem>>, vector<1x8x256xbf16>
    %4 = vector.shape_cast %3 : vector<1x8x256xbf16> to vector<8x256xbf16>
    %c0_3 = arith.constant 0 : index
    %c0_4 = arith.constant 0 : index
    %c0_5 = arith.constant 0 : index
    %5 = vector.load %arg4[%c0_3, %c0_4, %c0_5] : memref<1x8x256xbf16, #tpu.memory_space<vmem>>, vector<1x8x256xbf16>
    %6 = vector.shape_cast %5 : vector<1x8x256xbf16> to vector<8x256xbf16>
    %cst = arith.constant dense<0.000000e+00> : vector<256x256xf32>
    %7 = tpu.matmul %6, %4, %cst {dimension_numbers = #tpu.dot_dimension_numbers<[0], [0], [1], [1], [0, 1, 1, 1], [], []>} : vector<8x256xbf16>, vector<8x256xbf16>, vector<256x256xf32> -> vector<256x256xf32>
    %c0_6 = arith.constant 0 : index
    %c0_7 = arith.constant 0 : index
    %8 = vector.load %arg8[%c0_6, %c0_7] : memref<1x256xf32, #tpu.memory_space<vmem>>, vector<1x256xf32>
    %cst_8 = arith.constant dense<0xFF800000> : vector<256xf32>
    %9 = vector.multi_reduction <maximumf>, %7, %cst_8 [0] : vector<256x256xf32> to vector<256xf32>
    %10 = vector.shape_cast %9 : vector<256xf32> to vector<1x256xf32>
    %11 = arith.maximumf %8, %10 : vector<1x256xf32>
    %12 = arith.subf %8, %11 : vector<1x256xf32>
    %13 = math.exp %12 : vector<1x256xf32>
    %14 = vector.broadcast %11 : vector<1x256xf32> to vector<256x256xf32>
    %15 = arith.subf %7, %14 : vector<256x256xf32>
    %16 = math.exp %15 : vector<256x256xf32>
    %c0_9 = arith.constant 0 : index
    %c0_10 = arith.constant 0 : index
    %17 = vector.load %arg9[%c0_9, %c0_10] : memref<1x256xf32, #tpu.memory_space<vmem>>, vector<1x256xf32>
    %18 = arith.mulf %13, %17 : vector<1x256xf32>
    %cst_11 = arith.constant dense<0.000000e+00> : vector<256xf32>
    %19 = vector.multi_reduction <add>, %16, %cst_11 [0] : vector<256x256xf32> to vector<256xf32>
    %20 = vector.shape_cast %19 : vector<256xf32> to vector<1x256xf32>
    %21 = arith.addf %18, %20 : vector<1x256xf32>
    %c0_12 = arith.constant 0 : index
    %c0_13 = arith.constant 0 : index
    %22 = vector.load %arg9[%c0_12, %c0_13] : memref<1x256xf32, #tpu.memory_space<vmem>>, vector<1x256xf32>
    tpu.vector_store %arg9[%c0_12, %c0_13], %21 {strides = array<i32>} : memref<1x256xf32, #tpu.memory_space<vmem>>, vector<1x256xf32>,
    %c0_14 = arith.constant 0 : index
    %c0_15 = arith.constant 0 : index
    %23 = vector.load %arg10[%c0_14, %c0_15] : memref<4x256xf32, #tpu.memory_space<vmem>>, vector<4x256xf32>
    %24 = vector.broadcast %13 : vector<1x256xf32> to vector<4x256xf32>
    %25 = arith.mulf %24, %23 : vector<4x256xf32>
    %c0_16 = arith.constant 0 : index
    %c0_17 = arith.constant 0 : index
    %c0_18 = arith.constant 0 : index
    %26 = vector.load %arg5[%c0_16, %c0_17, %c0_18] : memref<1x4x256xbf16, #tpu.memory_space<vmem>>, vector<1x4x256xbf16>
    %27 = vector.shape_cast %26 : vector<1x4x256xbf16> to vector<4x256xbf16>
    %28 = arith.truncf %16 : vector<256x256xf32> to vector<256x256xbf16>
    %cst_19 = arith.constant dense<0.000000e+00> : vector<4x256xf32>
    %29 = tpu.matmul %27, %28, %cst_19 {dimension_numbers = #tpu.dot_dimension_numbers<[1], [0], [0], [1], [0, 0, 1, 1], [], []>} : vector<4x256xbf16>, vector<256x256xbf16>, vector<4x256xf32> -> vector<4x256xf32>
    %30 = arith.addf %25, %29 : vector<4x256xf32>
    %c0_20 = arith.constant 0 : index
    %c0_21 = arith.constant 0 : index
    %31 = vector.load %arg10[%c0_20, %c0_21] : memref<4x256xf32, #tpu.memory_space<vmem>>, vector<4x256xf32>
    tpu.vector_store %arg10[%c0_20, %c0_21], %30 {strides = array<i32>} : memref<4x256xf32, #tpu.memory_space<vmem>>, vector<4x256xf32>,
    %c0_22 = arith.constant 0 : index
    %c0_23 = arith.constant 0 : index
    %32 = vector.load %arg8[%c0_22, %c0_23] : memref<1x256xf32, #tpu.memory_space<vmem>>, vector<1x256xf32>
    tpu.vector_store %arg8[%c0_22, %c0_23], %11 {strides = array<i32>} : memref<1x256xf32, #tpu.memory_space<vmem>>, vector<1x256xf32>,
    %c0_i32_24 = arith.constant 0 : i32
    %33 = arith.cmpi eq, %arg2, %c0_i32_24 : i32
    %34 = arith.extui %33 : i1 to i32
    %c0_i32_25 = arith.constant 0 : i32
    %35 = arith.cmpi ne, %34, %c0_i32_25 : i32
    scf.if %35 {
      %c0_26 = arith.constant 0 : index
      %c0_27 = arith.constant 0 : index
      %36 = vector.load %arg9[%c0_26, %c0_27] : memref<1x256xf32, #tpu.memory_space<vmem>>, vector<1x256xf32>
      %37 = tpu.reciprocal %36 {approx = true} : vector<1x256xf32> -> vector<1x256xf32>
      %c0_28 = arith.constant 0 : index
      %c0_29 = arith.constant 0 : index
      %38 = vector.load %arg10[%c0_28, %c0_29] : memref<4x256xf32, #tpu.memory_space<vmem>>, vector<4x256xf32>
      %39 = vector.broadcast %37 : vector<1x256xf32> to vector<4x256xf32>
      %40 = arith.mulf %38, %39 : vector<4x256xf32>
      %c0_30 = arith.constant 0 : index
      %c0_31 = arith.constant 0 : index
      %c0_32 = arith.constant 0 : index
      %41 = vector.load %arg6[%c0_30, %c0_31, %c0_32] : memref<1x4x256xf32, #tpu.memory_space<vmem>>, vector<1x4x256xf32>
      %42 = vector.shape_cast %41 : vector<1x4x256xf32> to vector<4x256xf32>
      %43 = arith.addf %40, %42 : vector<4x256xf32>
      %c0_33 = arith.constant 0 : index
      %c0_34 = arith.constant 0 : index
      %c0_35 = arith.constant 0 : index
      %44 = vector.load %arg7[%c0_33, %c0_34, %c0_35] : memref<1x4x256xf32, #tpu.memory_space<vmem>>, vector<1x4x256xf32>
      %45 = vector.shape_cast %44 : vector<1x4x256xf32> to vector<4x256xf32>
      %46 = vector.shape_cast %43 : vector<4x256xf32> to vector<1x4x256xf32>
      tpu.vector_store %arg7[%c0_33, %c0_34, %c0_35], %46 {strides = array<i32>} : memref<1x4x256xf32, #tpu.memory_space<vmem>>, vector<1x4x256xf32>,
    } else {
    }
    return
  }
  func.func @transform_0(%arg0: i32, %arg1: i32, %arg2: i32) -> (i32, i32, i32) {
    %c0_i32 = arith.constant 0 : i32
    %c0_i32_0 = arith.constant 0 : i32
    return %arg0, %c0_i32, %arg1 : i32, i32, i32
  }
  func.func @transform_1(%arg0: i32, %arg1: i32, %arg2: i32) -> (i32, i32, i32) {
    %c0_i32 = arith.constant 0 : i32
    %c0_i32_0 = arith.constant 0 : i32
    return %arg0, %c0_i32, %arg2 : i32, i32, i32
  }
  func.func @transform_2(%arg0: i32, %arg1: i32, %arg2: i32) -> (i32, i32, i32) {
    %c0_i32 = arith.constant 0 : i32
    %c0_i32_0 = arith.constant 0 : i32
    return %arg0, %c0_i32, %arg2 : i32, i32, i32
  }
  func.func @transform_3(%arg0: i32, %arg1: i32, %arg2: i32) -> (i32, i32, i32) {
    %c0_i32 = arith.constant 0 : i32
    %c0_i32_0 = arith.constant 0 : i32
    return %arg0, %c0_i32, %arg1 : i32, i32, i32
  }
  func.func @transform_4(%arg0: i32, %arg1: i32, %arg2: i32) -> (i32, i32, i32) {
    %c0_i32 = arith.constant 0 : i32
    %c0_i32_0 = arith.constant 0 : i32
    return %arg0, %c0_i32, %arg1 : i32, i32, i32
  }
}

</mosaic_0001>

<llo_original>
// kernel: tpu_custom_call.1
$region0: #{tpu_custom_call.1}
  #allocation0 [shape = 'u32[]', space=smem, size = 0x4, offset = 0x4, fixed_abs, tag = 'smem constant byte address 0x4 - core index']
  #allocation1 [shape = 'u32[144,128]{1,0:T(1,128)}', space=vmem, size = 0x12000, scoped, tag = 'internal scratch']
  #allocation2 [shape = 'f32[1,256]{1,0:T(1,128)}', space=vmem, size = 0x400, scoped, tag = 'scratch operand']
  #allocation3 [shape = 'f32[1,256]{1,0:T(1,128)}', space=vmem, size = 0x400, scoped, tag = 'scratch operand']
  #allocation4 [shape = 'f32[4,256]{1,0:T(4,128)}', space=vmem, size = 0x1000, scoped, tag = 'scratch operand']
  %s0 = inlined_call_operand.hbm [shape: bf16[2,8,256], index: 0, kind: input, shape index: {}]
  %s1 = inlined_call_operand.hbm [shape: bf16[2,8,256], index: 1, kind: input, shape index: {}]
  %s2 = inlined_call_operand.hbm [shape: bf16[2,4,256], index: 2, kind: input, shape index: {}]
  %s3 = inlined_call_operand.hbm [shape: f32[2,4,256], index: 3, kind: input, shape index: {}]
  %s4 = inlined_call_operand.hbm [shape: f32[2,4,256], index: 4, kind: output, shape index: {}]
  %s5 = sld [smem:[#allocation0]]
  $region73: #{tpu_custom_call.1} parent=0
    _
  %s7 = ssub.s32 1, %s5
  %s8 = scalar_select 0, %s7, %s5
  $region1: #{tpu_custom_call.1} parent=0
    #allocation5 [shape = 'u8[8192]{0}', space=vmem, size = 0x2000, scoped, tag = 'input window, operand 0']
    #allocation6 [shape = 's32[2]{0}', space=sflag, size = 0x8, scoped, tag = 'scoped memory for tpu_custom_call.1']
    #allocation7 [shape = 's32[2]{0}', space=sflag, size = 0x8, scoped, tag = 'scoped memory for tpu_custom_call.1']
    #allocation8 [shape = 'u8[8192]{0}', space=vmem, size = 0x2000, scoped, tag = 'input window, operand 1']
    #allocation9 [shape = 's32[2]{0}', space=sflag, size = 0x8, scoped, tag = 'scoped memory for tpu_custom_call.1']
    #allocation10 [shape = 'u8[4096]{0}', space=vmem, size = 0x1000, scoped, tag = 'input window, operand 2']
    #allocation11 [shape = 'u8[8192]{0}', space=vmem, size = 0x2000, scoped, tag = 'input window, operand 3']
    #allocation12 [shape = 's32[2]{0}', space=sflag, size = 0x8, scoped, tag = 'scoped memory for tpu_custom_call.1']
    #allocation13 [shape = 'u8[8192]{0}', space=vmem, size = 0x2000, scoped, tag = 'output window, operand 0']
    %9 = vsyncpa [#allocation6], 0
    %s10 = scalar_lea.sflag [#allocation6], 1
    %11 = vsyncpa %s10, 0
    %12 = vsyncpa [#allocation9], 0
    %s13 = scalar_lea.sflag [#allocation9], 1
    %14 = vsyncpa %s13, 0
    %15 = vsyncpa [#allocation12], 0
    %s16 = scalar_lea.sflag [#allocation12], 1
    %17 = vsyncpa %s16, 0
    %18 = vsyncpa [#allocation7], 0
    %s19 = scalar_lea.sflag [#allocation7], 1
    %20 = vsyncpa %s19, 0
    loop: start=0, step=1, limit=4
    $region2: #{tpu_custom_call.1} parent=1 // loop_pre_header
      _
    $region3: #{tpu_custom_call.1} parent=1 // loop_header
      %s22 = sphi 0, %s26
      %p23 = scmp.ge.s32.totalorder %s22, 4
      %s29 = sphi 0, %s48
      %s30 = sphi 0, %s44
      %s31 = sphi 0, %s40
      %s32 = sphi 0, %s29
      %s33 = sphi 0, %s30
      %s34 = sphi 0, %s31
      %s35 = sphi 0, %s32
      %s36 = sphi 0, %s33
      %s37 = sphi 0, %s34
      %s53 = sphi 0, %s55
      %s56 = sphi 0, %s53
      %s57 = sphi 0, %s56
      %s73 = sphi 0, %s57
      %s81 = sphi 0, %s83
      %s84 = sphi 0, %s81
      %s85 = sphi 0, %s84
      %s101 = sphi 0, %s85
      %s109 = sphi 0, %s111
      %s112 = sphi 0, %s109
      %s113 = sphi 0, %s112
      %s129 = sphi 0, %s113
      %s137 = sphi 0, %s139
      %s140 = sphi 0, %s137
      %s141 = sphi 0, %s140
      %s157 = sphi 0, %s141
      %s165 = sphi 0, %s167
      %s168 = sphi 0, %s165
      %s169 = sphi 0, %s168
      %s185 = sphi 0, %s169
    $region4: #{tpu_custom_call.1} parent=1 // loop_header_branch
      %25 = sbr.rel (%p23) target = $region8
    $region5: #{tpu_custom_call.1} parent=1 // loop_body
      %s27 = ssub.s32 %s22, 1
      %s28 = ssub.s32 %s22, 2
      %s38 = sadd.s32 1, %s31
      %p39 = scmp.ge.s32.totalorder %s38, 1
      %s40 = scalar_select %p39, 0, %s38
      %s41 = sadd.s32 1, %s30
      %s42 = scalar_select %p39, %s41, %s30
      %p43 = scmp.ge.s32.totalorder %s42, 1
      %s44 = scalar_select %p43, 0, %s42
      %s45 = sadd.s32 1, %s29
      %s46 = scalar_select %p43, %s45, %s29
      %p47 = scmp.ge.s32.totalorder %s46, 2
      %s48 = scalar_select %p47, 0, %s46
      %s49 = ssub.s32 %s29, %s48
      %s50 = ssub.s32 %s30, %s44
      %s51 = sor.u32 %s49, %s50
      %p52 = scmp.eq.s32.totalorder %s51, 0
      %s54 = sadd.s32 %s53, 1
      %s55 = scalar_select %p52, %s53, %s54
      %p58 = pneg %p52
      %p59 = scmp.eq.s32.totalorder %s22, 1
      %p60 = por %p58, %p59
      %p61 = scmp.ne.s32.totalorder %s53, %s56
      %p62 = scmp.eq.s32.totalorder %s22, 0
      %p63 = por %p61, %p62
      %p64 = scmp.ne.s32.totalorder %s53, %s56
      %p65 = scmp.eq.s32.totalorder %s27, 1
      %p66 = por %p64, %p65
      %p67 = scmp.ne.s32.totalorder %s56, %s57
      %p68 = scmp.eq.s32.totalorder %s27, 0
      %p69 = por %p67, %p68
      %p70 = scmp.ne.s32.totalorder %s56, %s57
      %p71 = scmp.eq.s32.totalorder %s28, 1
      %p72 = por %p70, %p71
      %p74 = scmp.ne.s32.totalorder %s57, %s73
      %p75 = scmp.eq.s32.totalorder %s28, 0
      %p76 = por %p74, %p75
      %s77 = ssub.s32 %s29, %s48
      %s78 = ssub.s32 %s31, %s40
      %s79 = sor.u32 %s77, %s78
      %p80 = scmp.eq.s32.totalorder %s79, 0
      %s82 = sadd.s32 %s81, 1
      %s83 = scalar_select %p80, %s81, %s82
      %p86 = pneg %p80
      %p87 = scmp.eq.s32.totalorder %s22, 1
      %p88 = por %p86, %p87
      %p89 = scmp.ne.s32.totalorder %s81, %s84
      %p90 = scmp.eq.s32.totalorder %s22, 0
      %p91 = por %p89, %p90
      %p92 = scmp.ne.s32.totalorder %s81, %s84
      %p93 = scmp.eq.s32.totalorder %s27, 1
      %p94 = por %p92, %p93
      %p95 = scmp.ne.s32.totalorder %s84, %s85
      %p96 = scmp.eq.s32.totalorder %s27, 0
      %p97 = por %p95, %p96
      %p98 = scmp.ne.s32.totalorder %s84, %s85
      %p99 = scmp.eq.s32.totalorder %s28, 1
      %p100 = por %p98, %p99
      %p102 = scmp.ne.s32.totalorder %s85, %s101
      %p103 = scmp.eq.s32.totalorder %s28, 0
      %p104 = por %p102, %p103
      %s105 = ssub.s32 %s29, %s48
      %s106 = ssub.s32 %s31, %s40
      %s107 = sor.u32 %s105, %s106
      %p108 = scmp.eq.s32.totalorder %s107, 0
      %s110 = sadd.s32 %s109, 1
      %s111 = scalar_select %p108, %s109, %s110
      %p114 = pneg %p108
      %p115 = scmp.eq.s32.totalorder %s22, 1
      %p116 = por %p114, %p115
      %p117 = scmp.ne.s32.totalorder %s109, %s112
      %p118 = scmp.eq.s32.totalorder %s22, 0
      %p119 = por %p117, %p118
      %p120 = scmp.ne.s32.totalorder %s109, %s112
      %p121 = scmp.eq.s32.totalorder %s27, 1
      %p122 = por %p120, %p121
      %p123 = scmp.ne.s32.totalorder %s112, %s113
      %p124 = scmp.eq.s32.totalorder %s27, 0
      %p125 = por %p123, %p124
      %p126 = scmp.ne.s32.totalorder %s112, %s113
      %p127 = scmp.eq.s32.totalorder %s28, 1
      %p128 = por %p126, %p127
      %p130 = scmp.ne.s32.totalorder %s113, %s129
      %p131 = scmp.eq.s32.totalorder %s28, 0
      %p132 = por %p130, %p131
      %s133 = ssub.s32 %s29, %s48
      %s134 = ssub.s32 %s30, %s44
      %s135 = sor.u32 %s133, %s134
      %p136 = scmp.eq.s32.totalorder %s135, 0
      %s138 = sadd.s32 %s137, 1
      %s139 = scalar_select %p136, %s137, %s138
      %p142 = pneg %p136
      %p143 = scmp.eq.s32.totalorder %s22, 1
      %p144 = por %p142, %p143
      %p145 = scmp.ne.s32.totalorder %s137, %s140
      %p146 = scmp.eq.s32.totalorder %s22, 0
      %p147 = por %p145, %p146
      %p148 = scmp.ne.s32.totalorder %s137, %s140
      %p149 = scmp.eq.s32.totalorder %s27, 1
      %p150 = por %p148, %p149
      %p151 = scmp.ne.s32.totalorder %s140, %s141
      %p152 = scmp.eq.s32.totalorder %s27, 0
      %p153 = por %p151, %p152
      %p154 = scmp.ne.s32.totalorder %s140, %s141
      %p155 = scmp.eq.s32.totalorder %s28, 1
      %p156 = por %p154, %p155
      %p158 = scmp.ne.s32.totalorder %s141, %s157
      %p159 = scmp.eq.s32.totalorder %s28, 0
      %p160 = por %p158, %p159
      %s161 = ssub.s32 %s29, %s48
      %s162 = ssub.s32 %s30, %s44
      %s163 = sor.u32 %s161, %s162
      %p164 = scmp.eq.s32.totalorder %s163, 0
      %s166 = sadd.s32 %s165, 1
      %s167 = scalar_select %p164, %s165, %s166
      %p170 = pneg %p164
      %p171 = scmp.eq.s32.totalorder %s22, 1
      %p172 = por %p170, %p171
      %p173 = scmp.ne.s32.totalorder %s165, %s168
      %p174 = scmp.eq.s32.totalorder %s22, 0
      %p175 = por %p173, %p174
      %p176 = scmp.ne.s32.totalorder %s165, %s168
      %p177 = scmp.eq.s32.totalorder %s27, 1
      %p178 = por %p176, %p177
      %p179 = scmp.ne.s32.totalorder %s168, %s169
      %p180 = scmp.eq.s32.totalorder %s27, 0
      %p181 = por %p179, %p180
      %p182 = scmp.ne.s32.totalorder %s168, %s169
      %p183 = scmp.eq.s32.totalorder %s28, 1
      %p184 = por %p182, %p183
      %p186 = scmp.ne.s32.totalorder %s169, %s185
      %p187 = scmp.eq.s32.totalorder %s28, 0
      %p188 = por %p186, %p187
      %p189 = scmp.le.s32.totalorder 1, %s22
      %p190 = scmp.lt.s32.totalorder %s22, 3
      %p191 = pnand %p189, %p190
      %p192 = pneg %p191
      // Predicated region
      $region9: #{tpu_custom_call.1} parent=5 // pred_check
        _
      $region10: #{tpu_custom_call.1} parent=5 // pred_check_branch
        %194 = sbr.rel (%p191) target = $region12
      $region11: #{tpu_custom_call.1} parent=5 // pred_region
        %s195 = ssub.s32 %s22, 1
      $region12: #{tpu_custom_call.1} parent=5 // pred_fallthru
        _
      %p196 = scmp.lt.s32.totalorder %s22, 2
      // Predicated region
      $region13: #{tpu_custom_call.1} parent=5 // pred_check
        %p197 = pneg %p196
      $region14: #{tpu_custom_call.1} parent=5 // pred_check_branch
        %199 = sbr.rel (%p197) target = $region16
      $region15: #{tpu_custom_call.1} parent=5 // pred_region
        // Predicated region
        $region17: #{tpu_custom_call.1} parent=15 // pred_check
          %p200 = pneg %p63
        $region18: #{tpu_custom_call.1} parent=15 // pred_check_branch
          %202 = sbr.rel (%p200) target = $region20
        $region19: #{tpu_custom_call.1} parent=15 // pred_region
          %s203 = sand.u32 %s53, 1
          %s204 = scalar_lea.sflag [#allocation6], %s203
          %s205 = sand.u32 %s53, 1
          %s206 = smul.addr %s205, 8
          %s207 = scalar_lea.vmem [#allocation5], %s206
          %s208 = smul.u32 2, %s30
          %s210 = ssub.s32 128, 128
          %211 = vsyncadd %s204, %s210
          %s212 = smul.addr %s29, 2
          %s213 = sadd.s32 %s208, %s212
          %s214 = smul.addr %s213, 64
          %s215 = scalar_lea.hbm %s0, %s214
          %s217 = sshll.u32 %s207, 4
          %s218 = int_to_ptr.vmem [resolvable:$true] %s217
          %220 = dma.hbm_to_vmem [thread:$0]  %s215, 128, %s218, %s204
        $region20: #{tpu_custom_call.1} parent=15 // pred_fallthru
          _
        // Predicated region
        $region21: #{tpu_custom_call.1} parent=15 // pred_check
          %p221 = pneg %p91
        $region22: #{tpu_custom_call.1} parent=15 // pred_check_branch
          %223 = sbr.rel (%p221) target = $region24
        $region23: #{tpu_custom_call.1} parent=15 // pred_region
          %s224 = sand.u32 %s22, 1
          %s225 = scalar_lea.sflag [#allocation9], %s224
          %s226 = sand.u32 %s81, 1
          %s227 = smul.addr %s226, 8
          %s228 = scalar_lea.vmem [#allocation8], %s227
          %s229 = smul.u32 2, %s31
          %s231 = ssub.s32 128, 128
          %232 = vsyncadd %s225, %s231
          %s233 = smul.addr %s29, 2
          %s234 = sadd.s32 %s229, %s233
          %s235 = smul.addr %s234, 64
          %s236 = scalar_lea.hbm %s1, %s235
          %s238 = sshll.u32 %s228, 4
          %s239 = int_to_ptr.vmem [resolvable:$true] %s238
          %241 = dma.hbm_to_vmem [thread:$0]  %s236, 128, %s239, %s225
        $region24: #{tpu_custom_call.1} parent=15 // pred_fallthru
          _
        // Predicated region
        $region25: #{tpu_custom_call.1} parent=15 // pred_check
          %p242 = pneg %p119
        $region26: #{tpu_custom_call.1} parent=15 // pred_check_branch
          %244 = sbr.rel (%p242) target = $region28
        $region27: #{tpu_custom_call.1} parent=15 // pred_region
          %s245 = sand.u32 %s22, 1
          %s246 = scalar_lea.sflag [#allocation9], %s245
          %s247 = sand.u32 %s109, 1
          %s248 = smul.addr %s247, 4
          %s249 = scalar_lea.vmem [#allocation10], %s248
          %s250 = smul.u32 2, %s31
          %s252 = ssub.s32 64, 64
          %253 = vsyncadd %s246, %s252
          %s254 = smul.addr %s29, 2
          %s255 = sadd.s32 %s250, %s254
          %s256 = smul.addr %s255, 32
          %s257 = scalar_lea.hbm %s2, %s256
          %s259 = sshll.u32 %s249, 4
          %s260 = int_to_ptr.vmem [resolvable:$true] %s259
          %262 = dma.hbm_to_vmem [thread:$0]  %s257, 64, %s260, %s246
        $region28: #{tpu_custom_call.1} parent=15 // pred_fallthru
          _
        // Predicated region
        $region29: #{tpu_custom_call.1} parent=15 // pred_check
          %p263 = pneg %p147
        $region30: #{tpu_custom_call.1} parent=15 // pred_check_branch
          %265 = sbr.rel (%p263) target = $region32
        $region31: #{tpu_custom_call.1} parent=15 // pred_region
          %s266 = sand.u32 %s137, 1
          %s267 = scalar_lea.sflag [#allocation12], %s266
          %s268 = sand.u32 %s137, 1
          %s269 = smul.addr %s268, 8
          %s270 = scalar_lea.vmem [#allocation11], %s269
          %s271 = smul.u32 2, %s30
          %s273 = ssub.s32 128, 128
          %274 = vsyncadd %s267, %s273
          %s275 = smul.addr %s29, 2
          %s276 = sadd.s32 %s271, %s275
          %s277 = smul.addr %s276, 64
          %s278 = scalar_lea.hbm %s3, %s277
          %s280 = sshll.u32 %s270, 4
          %s281 = int_to_ptr.vmem [resolvable:$true] %s280
          %283 = dma.hbm_to_vmem [thread:$0]  %s278, 128, %s281, %s267
        $region32: #{tpu_custom_call.1} parent=15 // pred_fallthru
          _
      $region16: #{tpu_custom_call.1} parent=5 // pred_fallthru
        _
      %p284 = scmp.le.s32.totalorder 1, %s22
      %p285 = scmp.lt.s32.totalorder %s22, 3
      %p286 = pnand %p284, %p285
      %p287 = pneg %p286
      // Predicated region
      $region33: #{tpu_custom_call.1} parent=5 // pred_check
        _
      $region34: #{tpu_custom_call.1} parent=5 // pred_check_branch
        %289 = sbr.rel (%p286) target = $region36
      $region35: #{tpu_custom_call.1} parent=5 // pred_region
        %s290 = ssub.s32 %s22, 1
        %s291 = sand.u32 %s56, 1
        %s292 = scalar_lea.sflag [#allocation6], %s291
        %s293 = sand.u32 %s56, 1
        %s294 = smul.addr %s293, 8
        %s295 = scalar_lea.vmem [#allocation5], %s294
        // Predicated region
        $region37: #{tpu_custom_call.1} parent=35 // pred_check
          %p296 = pneg %p69
        $region38: #{tpu_custom_call.1} parent=35 // pred_check_branch
          %298 = sbr.rel (%p296) target = $region40
        $region39: #{tpu_custom_call.1} parent=35 // pred_region
          %299 = dma.done %s292, 128
        $region40: #{tpu_custom_call.1} parent=35 // pred_fallthru
          _
        %s300 = sand.u32 %s27, 1
        %s301 = scalar_lea.sflag [#allocation9], %s300
        %s302 = sand.u32 %s84, 1
        %s303 = smul.addr %s302, 8
        %s304 = scalar_lea.vmem [#allocation8], %s303
        // Predicated region
        $region41: #{tpu_custom_call.1} parent=35 // pred_check
          %p305 = pneg %p97
        $region42: #{tpu_custom_call.1} parent=35 // pred_check_branch
          %307 = sbr.rel (%p305) target = $region44
        $region43: #{tpu_custom_call.1} parent=35 // pred_region
          %308 = dma.done %s301, 128
        $region44: #{tpu_custom_call.1} parent=35 // pred_fallthru
          _
        %s309 = sand.u32 %s27, 1
        %s310 = scalar_lea.sflag [#allocation9], %s309
        %s311 = sand.u32 %s112, 1
        %s312 = smul.addr %s311, 4
        %s313 = scalar_lea.vmem [#allocation10], %s312
        // Predicated region
        $region45: #{tpu_custom_call.1} parent=35 // pred_check
          %p314 = pneg %p125
        $region46: #{tpu_custom_call.1} parent=35 // pred_check_branch
          %316 = sbr.rel (%p314) target = $region48
        $region47: #{tpu_custom_call.1} parent=35 // pred_region
          %317 = dma.done %s310, 64
        $region48: #{tpu_custom_call.1} parent=35 // pred_fallthru
          _
        %s318 = sand.u32 %s140, 1
        %s319 = scalar_lea.sflag [#allocation12], %s318
        %s320 = sand.u32 %s140, 1
        %s321 = smul.addr %s320, 8
        %s322 = scalar_lea.vmem [#allocation11], %s321
        // Predicated region
        $region49: #{tpu_custom_call.1} parent=35 // pred_check
          %p323 = pneg %p153
        $region50: #{tpu_custom_call.1} parent=35 // pred_check_branch
          %325 = sbr.rel (%p323) target = $region52
        $region51: #{tpu_custom_call.1} parent=35 // pred_region
          %326 = dma.done %s319, 128
        $region52: #{tpu_custom_call.1} parent=35 // pred_fallthru
          _
        %s327 = sand.u32 %s56, 1
        %s328 = scalar_lea.sflag [#allocation6], %s327
        %s329 = sand.u32 %s56, 1
        %s330 = smul.addr %s329, 8
        %s331 = scalar_lea.vmem [#allocation5], %s330
        %p332 = pneg %p69
        %p333 = pneg %p66
        %s334 = sand.u32 %s27, 1
        %s335 = scalar_lea.sflag [#allocation9], %s334
        %s336 = sand.u32 %s84, 1
        %s337 = smul.addr %s336, 8
        %s338 = scalar_lea.vmem [#allocation8], %s337
        %p339 = pneg %p97
        %p340 = pneg %p94
        %s341 = sand.u32 %s27, 1
        %s342 = scalar_lea.sflag [#allocation9], %s341
        %s343 = sand.u32 %s112, 1
        %s344 = smul.addr %s343, 4
        %s345 = scalar_lea.vmem [#allocation10], %s344
        %p346 = pneg %p125
        %p347 = pneg %p122
        %s348 = sand.u32 %s140, 1
        %s349 = scalar_lea.sflag [#allocation12], %s348
        %s350 = sand.u32 %s140, 1
        %s351 = smul.addr %s350, 8
        %s352 = scalar_lea.vmem [#allocation11], %s351
        %p353 = pneg %p153
        %p354 = pneg %p150
        %p355 = pneg %p181
        %p356 = pneg %p178
        %s357 = sand.u32 %s168, 1
        %s358 = scalar_lea.sflag [#allocation7], %s357
        %s359 = sand.u32 %s168, 1
        %s360 = smul.addr %s359, 8
        %s361 = scalar_lea.vmem [#allocation13], %s360
        %s362 = smul.u32 2, %s33
        %s363 = smul.u32 2, %s34
        %s364 = smul.u32 2, %s34
        %s365 = smul.u32 2, %s33
        %s366 = smul.u32 2, %s33
        %p368 = scmp.eq.s32.totalorder %s34, 0
        // Predicated region
        $region53: #{tpu_custom_call.1} parent=35 // pred_check
          %p369 = pneg %p368
        $region54: #{tpu_custom_call.1} parent=35 // pred_check_branch
          %371 = sbr.rel (%p369) target = $region56
        $region55: #{tpu_custom_call.1} parent=35 // pred_region
          %v372 = vlaneseq
          %vm373 = vcmp.ge.s32.totalorder %v372, 0
          %vm374 = vcmp.lt.s32.totalorder %v372, 256
          %vm375 = vmand %vm373, %vm374
          %376 = vst.msk [vmem:[#allocation2] sm:$0x3] %vm375, -inf
          %377 = vst.msk [vmem:[#allocation3] sm:$0x3] %vm375, 0.0
          %378 = vst [vmem:[#allocation4] sm:$0xff] 0.0
        $region56: #{tpu_custom_call.1} parent=35 // pred_fallthru
          _
        %v379 = vld [vmem:[%s295] sm:$0xff]
        %v380 = vld [vmem:[%s304] sm:$0xff]
        %v382 = vunpack.c.l.b16 %v380
        %v383 = vunpack.c.h.b16 %v380
        %v384 = vpack.c.b16 %v382, %v382
        %v385 = vpack.c.b16 %v383, %v383
        %388 = vxpose.xlu0.c.b16.start [1/8] %v384, 128
        %389 = vxpose.xlu0.c.b16.cont [2/8] 0, 128
        %390 = vxpose.xlu0.c.b16.cont [3/8] 0, 128
        %391 = vxpose.xlu0.c.b16.cont [4/8] 0, 128
        %392 = vxpose.xlu0.c.b16.cont [5/8] 0, 128
        %393 = vxpose.xlu0.c.b16.cont [6/8] 0, 128
        %394 = vxpose.xlu0.c.b16.cont [7/8] 0, 128
        %395 = vxpose.xlu0.c.b16.end [8/8] 0, 128
        %v396 = vpop.trf.xlu0
        %v397 = vpop.trf.xlu0
        %v398 = vpop.trf.xlu0
        %v399 = vpop.trf.xlu0
        %v400 = vpop.trf.xlu0
        %v401 = vpop.trf.xlu0
        %v402 = vpop.trf.xlu0
        %v403 = vpop.trf.xlu0
        %404 = vxpose.xlu0.c.b16.start [1/8] %v385, 128
        %405 = vxpose.xlu0.c.b16.cont [2/8] 0, 128
        %406 = vxpose.xlu0.c.b16.cont [3/8] 0, 128
        %407 = vxpose.xlu0.c.b16.cont [4/8] 0, 128
        %408 = vxpose.xlu0.c.b16.cont [5/8] 0, 128
        %409 = vxpose.xlu0.c.b16.cont [6/8] 0, 128
        %410 = vxpose.xlu0.c.b16.cont [7/8] 0, 128
        %411 = vxpose.xlu0.c.b16.end [8/8] 0, 128
        %v412 = vpop.trf.xlu0
        %v413 = vpop.trf.xlu0
        %v414 = vpop.trf.xlu0
        %v415 = vpop.trf.xlu0
        %v416 = vpop.trf.xlu0
        %v417 = vpop.trf.xlu0
        %v418 = vpop.trf.xlu0
        %v419 = vpop.trf.xlu0
        %v421 = vunpack.c.l.b16 %v379
        %v422 = vunpack.c.h.b16 %v379
        %v423 = vpack.c.b16 %v421, %v421
        %v424 = vpack.c.b16 %v422, %v422
        %vm425 = vcmask 64512
        %v427 = vsel %vm425, %v396, 0
        %v430 = vsel %vm425, %v397, 0
        %v433 = vsel %vm425, %v398, 0
        %v436 = vsel %vm425, %v399, 0
        %v439 = vsel %vm425, %v400, 0
        %v442 = vsel %vm425, %v401, 0
        %v445 = vsel %vm425, %v402, 0
        %v448 = vsel %vm425, %v403, 0
        %v451 = vsel %vm425, %v412, 0
        %v454 = vsel %vm425, %v413, 0
        %v457 = vsel %vm425, %v414, 0
        %v460 = vsel %vm425, %v415, 0
        %v463 = vsel %vm425, %v416, 0
        %v466 = vsel %vm425, %v417, 0
        %v469 = vsel %vm425, %v418, 0
        %v472 = vsel %vm425, %v419, 0
        %vm474 = vcmask 1043456
        %v476 = vsel %vm474, %v423, 0
        %v479 = vsel %vm474, %v424, 0
        %481 = vmatprep.subr.bf16.mxu0 %v479
        %482 = vmatpush1.bf16.msra.mxu0 %v476
        %483 = vmatprep.subr.bf16.mxu0 0
        %484 = vmatpush1.bf16.msra.mxu0 0
        %485 = vmatprep.subr.bf16.mxu0 0
        %486 = vmatpush1.bf16.msra.mxu0 0
        %487 = vmatprep.subr.bf16.mxu0 0
        %488 = vmatpush1.bf16.msra.mxu0 0
        %489 = vmatprep.subr.bf16.mxu0 0
        %490 = vmatpush1.bf16.msra.mxu0 0
        %491 = vmatprep.subr.bf16.mxu0 0
        %492 = vmatpush1.bf16.msra.mxu0 0
        %493 = vmatprep.subr.bf16.mxu0 0
        %494 = vmatpush1.bf16.msra.mxu0 0
        %495 = vmatprep.subr.bf16.mxu0 0
        %496 = vmatpush1.bf16.msra.mxu0 0
        %497 = vmatprep.subr.bf16.mxu0 0
        %498 = vmatpush1.bf16.msra.mxu0 0
        %499 = vmatprep.subr.bf16.mxu0 0
        %500 = vmatpush1.bf16.msra.mxu0 0
        %501 = vmatprep.subr.bf16.mxu0 0
        %502 = vmatpush1.bf16.msra.mxu0 0
        %503 = vmatprep.subr.bf16.mxu0 0
        %504 = vmatpush1.bf16.msra.mxu0 0
        %505 = vmatprep.subr.bf16.mxu0 0
        %506 = vmatpush1.bf16.msra.mxu0 0
        %507 = vmatprep.subr.bf16.mxu0 0
        %508 = vmatpush1.bf16.msra.mxu0 0
        %509 = vmatprep.subr.bf16.mxu0 0
        %510 = vmatpush1.bf16.msra.mxu0 0
        %511 = vmatprep.subr.bf16.mxu0 0
        %512 = vmatpush1.bf16.msra.mxu0 0
        %513 = vmatprep.mubr.bf16.mxu0 0
        %514 = vmatmul.mubr.bf16.gmra.mrb[0].mxu0 %v427
        %v515 = vpop.f32.mrb[0].mxu0
        %v516 = vadd.f32 0.0, %v515
        %v517 = vpop.f32.mrb[0].mxu0
        %v518 = vadd.f32 0.0, %v517
        %v519 = vpop.f32.mrb[0].mxu0
        %v520 = vadd.f32 0.0, %v519
        %v521 = vpop.f32.mrb[0].mxu0
        %v522 = vadd.f32 0.0, %v521
        %523 = vmatprep.mubr.bf16.mxu0 0
        %524 = vmatmul.mubr.bf16.gmra.mrb[0].mxu0 %v430
        %v525 = vpop.f32.mrb[0].mxu0
        %v526 = vadd.f32 0.0, %v525
        %v527 = vpop.f32.mrb[0].mxu0
        %v528 = vadd.f32 0.0, %v527
        %v529 = vpop.f32.mrb[0].mxu0
        %v530 = vadd.f32 0.0, %v529
        %v531 = vpop.f32.mrb[0].mxu0
        %v532 = vadd.f32 0.0, %v531
        %533 = vmatprep.mubr.bf16.mxu0 0
        %534 = vmatmul.mubr.bf16.gmra.mrb[0].mxu0 %v433
        %v535 = vpop.f32.mrb[0].mxu0
        %v536 = vadd.f32 0.0, %v535
        %v537 = vpop.f32.mrb[0].mxu0
        %v538 = vadd.f32 0.0, %v537
        %v539 = vpop.f32.mrb[0].mxu0
        %v540 = vadd.f32 0.0, %v539
        %v541 = vpop.f32.mrb[0].mxu0
        %v542 = vadd.f32 0.0, %v541
        %543 = vmatprep.mubr.bf16.mxu0 0
        %544 = vmatmul.mubr.bf16.gmra.mrb[0].mxu0 %v436
        %v545 = vpop.f32.mrb[0].mxu0
        %v546 = vadd.f32 0.0, %v545
        %v547 = vpop.f32.mrb[0].mxu0
        %v548 = vadd.f32 0.0, %v547
        %v549 = vpop.f32.mrb[0].mxu0
        %v550 = vadd.f32 0.0, %v549
        %v551 = vpop.f32.mrb[0].mxu0
        %v552 = vadd.f32 0.0, %v551
        %553 = vmatprep.mubr.bf16.mxu0 0
        %554 = vmatmul.mubr.bf16.gmra.mrb[0].mxu0 %v439
        %v555 = vpop.f32.mrb[0].mxu0
        %v556 = vadd.f32 0.0, %v555
        %v557 = vpop.f32.mrb[0].mxu0
        %v558 = vadd.f32 0.0, %v557
        %v559 = vpop.f32.mrb[0].mxu0
        %v560 = vadd.f32 0.0, %v559
        %v561 = vpop.f32.mrb[0].mxu0
        %v562 = vadd.f32 0.0, %v561
        %563 = vmatprep.mubr.bf16.mxu0 0
        %564 = vmatmul.mubr.bf16.gmra.mrb[0].mxu0 %v442
        %v565 = vpop.f32.mrb[0].mxu0
        %v566 = vadd.f32 0.0, %v565
        %v567 = vpop.f32.mrb[0].mxu0
        %v568 = vadd.f32 0.0, %v567
        %v569 = vpop.f32.mrb[0].mxu0
        %v570 = vadd.f32 0.0, %v569
        %v571 = vpop.f32.mrb[0].mxu0
        %v572 = vadd.f32 0.0, %v571
        %573 = vmatprep.mubr.bf16.mxu0 0
        %574 = vmatmul.mubr.bf16.gmra.mrb[0].mxu0 %v445
        %v575 = vpop.f32.mrb[0].mxu0
        %v576 = vadd.f32 0.0, %v575
        %v577 = vpop.f32.mrb[0].mxu0
        %v578 = vadd.f32 0.0, %v577
        %v579 = vpop.f32.mrb[0].mxu0
        %v580 = vadd.f32 0.0, %v579
        %v581 = vpop.f32.mrb[0].mxu0
        %v582 = vadd.f32 0.0, %v581
        %583 = vmatprep.mubr.bf16.mxu0 0
        %584 = vmatmul.mubr.bf16.gmra.mrb[0].mxu0 %v448
        %v585 = vpop.f32.mrb[0].mxu0
        %v586 = vadd.f32 0.0, %v585
        %v587 = vpop.f32.mrb[0].mxu0
        %v588 = vadd.f32 0.0, %v587
        %v589 = vpop.f32.mrb[0].mxu0
        %v590 = vadd.f32 0.0, %v589
        %v591 = vpop.f32.mrb[0].mxu0
        %v592 = vadd.f32 0.0, %v591
        %593 = vmatprep.mubr.bf16.mxu0 0
        %594 = vmatmul.mubr.bf16.gmra.mrb[0].mxu0 %v451
        %v595 = vpop.f32.mrb[0].mxu0
        %v596 = vadd.f32 0.0, %v595
        %v597 = vpop.f32.mrb[0].mxu0
        %v598 = vadd.f32 0.0, %v597
        %v599 = vpop.f32.mrb[0].mxu0
        %v600 = vadd.f32 0.0, %v599
        %v601 = vpop.f32.mrb[0].mxu0
        %v602 = vadd.f32 0.0, %v601
        %603 = vmatprep.mubr.bf16.mxu0 0
        %604 = vmatmul.mubr.bf16.gmra.mrb[0].mxu0 %v454
        %v605 = vpop.f32.mrb[0].mxu0
        %v606 = vadd.f32 0.0, %v605
        %v607 = vpop.f32.mrb[0].mxu0
        %v608 = vadd.f32 0.0, %v607
        %v609 = vpop.f32.mrb[0].mxu0
        %v610 = vadd.f32 0.0, %v609
        %v611 = vpop.f32.mrb[0].mxu0
        %v612 = vadd.f32 0.0, %v611
        %613 = vmatprep.mubr.bf16.mxu0 0
        %614 = vmatmul.mubr.bf16.gmra.mrb[0].mxu0 %v457
        %v615 = vpop.f32.mrb[0].mxu0
        %v616 = vadd.f32 0.0, %v615
        %v617 = vpop.f32.mrb[0].mxu0
        %v618 = vadd.f32 0.0, %v617
        %v619 = vpop.f32.mrb[0].mxu0
        %v620 = vadd.f32 0.0, %v619
        %v621 = vpop.f32.mrb[0].mxu0
        %v622 = vadd.f32 0.0, %v621
        %623 = vmatprep.mubr.bf16.mxu0 0
        %624 = vmatmul.mubr.bf16.gmra.mrb[0].mxu0 %v460
        %v625 = vpop.f32.mrb[0].mxu0
        %v626 = vadd.f32 0.0, %v625
        %v627 = vpop.f32.mrb[0].mxu0
        %v628 = vadd.f32 0.0, %v627
        %v629 = vpop.f32.mrb[0].mxu0
        %v630 = vadd.f32 0.0, %v629
        %v631 = vpop.f32.mrb[0].mxu0
        %v632 = vadd.f32 0.0, %v631
        %633 = vmatprep.mubr.bf16.mxu0 0
        %634 = vmatmul.mubr.bf16.gmra.mrb[0].mxu0 %v463
        %v635 = vpop.f32.mrb[0].mxu0
        %v636 = vadd.f32 0.0, %v635
        %v637 = vpop.f32.mrb[0].mxu0
        %v638 = vadd.f32 0.0, %v637
        %v639 = vpop.f32.mrb[0].mxu0
        %v640 = vadd.f32 0.0, %v639
        %v641 = vpop.f32.mrb[0].mxu0
        %v642 = vadd.f32 0.0, %v641
        %643 = vmatprep.mubr.bf16.mxu0 0
        %644 = vmatmul.mubr.bf16.gmra.mrb[0].mxu0 %v466
        %v645 = vpop.f32.mrb[0].mxu0
        %v646 = vadd.f32 0.0, %v645
        %v647 = vpop.f32.mrb[0].mxu0
        %v648 = vadd.f32 0.0, %v647
        %v649 = vpop.f32.mrb[0].mxu0
        %v650 = vadd.f32 0.0, %v649
        %v651 = vpop.f32.mrb[0].mxu0
        %v652 = vadd.f32 0.0, %v651
        %653 = vmatprep.mubr.bf16.mxu0 0
        %654 = vmatmul.mubr.bf16.gmra.mrb[0].mxu0 %v469
        %v655 = vpop.f32.mrb[0].mxu0
        %v656 = vadd.f32 0.0, %v655
        %v657 = vpop.f32.mrb[0].mxu0
        %v658 = vadd.f32 0.0, %v657
        %v659 = vpop.f32.mrb[0].mxu0
        %v660 = vadd.f32 0.0, %v659
        %v661 = vpop.f32.mrb[0].mxu0
        %v662 = vadd.f32 0.0, %v661
        %663 = vmatprep.mubr.bf16.mxu0 0
        %664 = vmatmul.mubr.bf16.gmra.mrb[0].mxu0 %v472
        %v665 = vpop.f32.mrb[0].mxu0
        %v666 = vadd.f32 0.0, %v665
        %v667 = vpop.f32.mrb[0].mxu0
        %v668 = vadd.f32 0.0, %v667
        %v669 = vpop.f32.mrb[0].mxu0
        %v670 = vadd.f32 0.0, %v669
        %v671 = vpop.f32.mrb[0].mxu0
        %v672 = vadd.f32 0.0, %v671
        %673 = vdwg.mxu0
        %v674 = vld [vmem:[#allocation2] sm:$0x3]
        %v675 = vmax.f32 %v516, %v526
        %v676 = vmax.f32 %v520, %v530
        %v677 = vmax.f32 %v675, %v536
        %v678 = vmax.f32 %v676, %v540
        %v679 = vmax.f32 %v677, %v546
        %v680 = vmax.f32 %v678, %v550
        %v681 = vmax.f32 %v679, %v556
        %v682 = vmax.f32 %v680, %v560
        %v683 = vmax.f32 %v681, %v566
        %v684 = vmax.f32 %v682, %v570
        %v685 = vmax.f32 %v683, %v576
        %v686 = vmax.f32 %v684, %v580
        %v687 = vmax.f32 %v685, %v586
        %v688 = vmax.f32 %v686, %v590
        %v689 = vmax.f32 %v687, %v596
        %v690 = vmax.f32 %v688, %v600
        %v691 = vmax.f32 %v689, %v606
        %v692 = vmax.f32 %v690, %v610
        %v693 = vmax.f32 %v691, %v616
        %v694 = vmax.f32 %v692, %v620
        %v695 = vmax.f32 %v693, %v626
        %v696 = vmax.f32 %v694, %v630
        %v697 = vmax.f32 %v695, %v636
        %v698 = vmax.f32 %v696, %v640
        %v699 = vmax.f32 %v697, %v646
        %v700 = vmax.f32 %v698, %v650
        %v701 = vmax.f32 %v699, %v656
        %v702 = vmax.f32 %v700, %v660
        %v703 = vmax.f32 %v701, %v666
        %v704 = vmax.f32 %v702, %v670
        %v705 = vmax.f32 %v703, %v704
        %v706 = vrot.slane %v705, 4
        %v707 = vmax.f32 %v705, %v706
        %v708 = vrot.slane %v707, 2
        %v709 = vmax.f32 %v707, %v708
        %v710 = vrot.slane %v709, 1
        %v711 = vmax.f32 %v709, %v710
        %v712 = vmax.f32 %v518, %v528
        %v713 = vmax.f32 %v522, %v532
        %v714 = vmax.f32 %v712, %v538
        %v715 = vmax.f32 %v713, %v542
        %v716 = vmax.f32 %v714, %v548
        %v717 = vmax.f32 %v715, %v552
        %v718 = vmax.f32 %v716, %v558
        %v719 = vmax.f32 %v717, %v562
        %v720 = vmax.f32 %v718, %v568
        %v721 = vmax.f32 %v719, %v572
        %v722 = vmax.f32 %v720, %v578
        %v723 = vmax.f32 %v721, %v582
        %v724 = vmax.f32 %v722, %v588
        %v725 = vmax.f32 %v723, %v592
        %v726 = vmax.f32 %v724, %v598
        %v727 = vmax.f32 %v725, %v602
        %v728 = vmax.f32 %v726, %v608
        %v729 = vmax.f32 %v727, %v612
        %v730 = vmax.f32 %v728, %v618
        %v731 = vmax.f32 %v729, %v622
        %v732 = vmax.f32 %v730, %v628
        %v733 = vmax.f32 %v731, %v632
        %v734 = vmax.f32 %v732, %v638
        %v735 = vmax.f32 %v733, %v642
        %v736 = vmax.f32 %v734, %v648
        %v737 = vmax.f32 %v735, %v652
        %v738 = vmax.f32 %v736, %v658
        %v739 = vmax.f32 %v737, %v662
        %v740 = vmax.f32 %v738, %v668
        %v741 = vmax.f32 %v739, %v672
        %v742 = vmax.f32 %v740, %v741
        %v743 = vrot.slane %v742, 4
        %v744 = vmax.f32 %v742, %v743
        %v745 = vrot.slane %v744, 2
        %v746 = vmax.f32 %v744, %v745
        %v747 = vrot.slane %v746, 1
        %v748 = vmax.f32 %v746, %v747
        %v751 = vcombine.low %v711, %v748
        %v753 = vunpack.c.l.s4 1966171168
        %v754 = vunpack.c.0.s8 %v753
        %v755 = vlaneseq
        %v756 = vshrl.u32 %v755, 7
        %v757 = vsub.s32 %v754, %v756
        %v758 = vrot.slane %v751, %v757
        %v760 = vunpack.c.l.s4 1966171168
        %v761 = vunpack.c.0.s8 %v760
        %v762 = vlaneseq
        %v763 = vshrl.u32 %v762, 7
        %v764 = vsub.s32 %v761, %v763
        %v765 = vrot.slane %v758, %v764
        %v767 = vmax.f32 %v674, %v765
        %v768 = vsub.f32 %v674, %v767
        %v769 = vmul.f32 %v768, 1.442695
        %v770 = vpow.pop %v769
        %v772 = vlaneseq
        %v773 = vshrl.u32 %v772, 7
        %v774 = vsub.s32 0, %v773
        %v775 = vrot.slane %v767, %v774
        %v776 = vlaneseq
        %v777 = vshrl.u32 %v776, 7
        %v778 = vsub.s32 1, %v777
        %v779 = vrot.slane %v767, %v778
        %v782 = vsub.f32 %v516, %v775
        %v783 = vsub.f32 %v518, %v779
        %v784 = vsub.f32 %v520, %v775
        %v785 = vsub.f32 %v522, %v779
        %v786 = vsub.f32 %v526, %v775
        %v787 = vsub.f32 %v528, %v779
        %v788 = vsub.f32 %v530, %v775
        %v789 = vsub.f32 %v532, %v779
        %v790 = vsub.f32 %v536, %v775
        %v791 = vsub.f32 %v538, %v779
        %v792 = vsub.f32 %v540, %v775
        %v793 = vsub.f32 %v542, %v779
        %v794 = vsub.f32 %v546, %v775
        %v795 = vsub.f32 %v548, %v779
        %v796 = vsub.f32 %v550, %v775
        %v797 = vsub.f32 %v552, %v779
        %v798 = vsub.f32 %v556, %v775
        %v799 = vsub.f32 %v558, %v779
        %v800 = vsub.f32 %v560, %v775
        %v801 = vsub.f32 %v562, %v779
        %v802 = vsub.f32 %v566, %v775
        %v803 = vsub.f32 %v568, %v779
        %v804 = vsub.f32 %v570, %v775
        %v805 = vsub.f32 %v572, %v779
        %v806 = vsub.f32 %v576, %v775
        %v807 = vsub.f32 %v578, %v779
        %v808 = vsub.f32 %v580, %v775
        %v809 = vsub.f32 %v582, %v779
        %v810 = vsub.f32 %v586, %v775
        %v811 = vsub.f32 %v588, %v779
        %v812 = vsub.f32 %v590, %v775
        %v813 = vsub.f32 %v592, %v779
        %v814 = vsub.f32 %v596, %v775
        %v815 = vsub.f32 %v598, %v779
        %v816 = vsub.f32 %v600, %v775
        %v817 = vsub.f32 %v602, %v779
        %v818 = vsub.f32 %v606, %v775
        %v819 = vsub.f32 %v608, %v779
        %v820 = vsub.f32 %v610, %v775
        %v821 = vsub.f32 %v612, %v779
        %v822 = vsub.f32 %v616, %v775
        %v823 = vsub.f32 %v618, %v779
        %v824 = vsub.f32 %v620, %v775
        %v825 = vsub.f32 %v622, %v779
        %v826 = vsub.f32 %v626, %v775
        %v827 = vsub.f32 %v628, %v779
        %v828 = vsub.f32 %v630, %v775
        %v829 = vsub.f32 %v632, %v779
        %v830 = vsub.f32 %v636, %v775
        %v831 = vsub.f32 %v638, %v779
        %v832 = vsub.f32 %v640, %v775
        %v833 = vsub.f32 %v642, %v779
        %v834 = vsub.f32 %v646, %v775
        %v835 = vsub.f32 %v648, %v779
        %v836 = vsub.f32 %v650, %v775
        %v837 = vsub.f32 %v652, %v779
        %v838 = vsub.f32 %v656, %v775
        %v839 = vsub.f32 %v658, %v779
        %v840 = vsub.f32 %v660, %v775
        %v841 = vsub.f32 %v662, %v779
        %v842 = vsub.f32 %v666, %v775
        %v843 = vsub.f32 %v668, %v779
        %v844 = vsub.f32 %v670, %v775
        %v845 = vsub.f32 %v672, %v779
        %v846 = vmul.f32 %v782, 1.442695
        %v847 = vpow.pop %v846
        %v848 = vmul.f32 %v783, 1.442695
        %v849 = vpow.pop %v848
        %v850 = vmul.f32 %v784, 1.442695
        %v851 = vpow.pop %v850
        %v852 = vmul.f32 %v785, 1.442695
        %v853 = vpow.pop %v852
        %v854 = vmul.f32 %v786, 1.442695
        %v855 = vpow.pop %v854
        %v856 = vmul.f32 %v787, 1.442695
        %v857 = vpow.pop %v856
        %v858 = vmul.f32 %v788, 1.442695
        %v859 = vpow.pop %v858
        %v860 = vmul.f32 %v789, 1.442695
        %v861 = vpow.pop %v860
        %v862 = vmul.f32 %v790, 1.442695
        %v863 = vpow.pop %v862
        %v864 = vmul.f32 %v791, 1.442695
        %v865 = vpow.pop %v864
        %v866 = vmul.f32 %v792, 1.442695
        %v867 = vpow.pop %v866
        %v868 = vmul.f32 %v793, 1.442695
        %v869 = vpow.pop %v868
        %v870 = vmul.f32 %v794, 1.442695
        %v871 = vpow.pop %v870
        %v872 = vmul.f32 %v795, 1.442695
        %v873 = vpow.pop %v872
        %v874 = vmul.f32 %v796, 1.442695
        %v875 = vpow.pop %v874
        %v876 = vmul.f32 %v797, 1.442695
        %v877 = vpow.pop %v876
        %v878 = vmul.f32 %v798, 1.442695
        %v879 = vpow.pop %v878
        %v880 = vmul.f32 %v799, 1.442695
        %v881 = vpow.pop %v880
        %v882 = vmul.f32 %v800, 1.442695
        %v883 = vpow.pop %v882
        %v884 = vmul.f32 %v801, 1.442695
        %v885 = vpow.pop %v884
        %v886 = vmul.f32 %v802, 1.442695
        %v887 = vpow.pop %v886
        %v888 = vmul.f32 %v803, 1.442695
        %v889 = vpow.pop %v888
        %v890 = vmul.f32 %v804, 1.442695
        %v891 = vpow.pop %v890
        %v892 = vmul.f32 %v805, 1.442695
        %v893 = vpow.pop %v892
        %v894 = vmul.f32 %v806, 1.442695
        %v895 = vpow.pop %v894
        %v896 = vmul.f32 %v807, 1.442695
        %v897 = vpow.pop %v896
        %v898 = vmul.f32 %v808, 1.442695
        %v899 = vpow.pop %v898
        %v900 = vmul.f32 %v809, 1.442695
        %v901 = vpow.pop %v900
        %v902 = vmul.f32 %v810, 1.442695
        %v903 = vpow.pop %v902
        %v904 = vmul.f32 %v811, 1.442695
        %v905 = vpow.pop %v904
        %v906 = vmul.f32 %v812, 1.442695
        %v907 = vpow.pop %v906
        %v908 = vmul.f32 %v813, 1.442695
        %v909 = vpow.pop %v908
        %v910 = vmul.f32 %v814, 1.442695
        %v911 = vpow.pop %v910
        %v912 = vmul.f32 %v815, 1.442695
        %v913 = vpow.pop %v912
        %v914 = vmul.f32 %v816, 1.442695
        %v915 = vpow.pop %v914
        %v916 = vmul.f32 %v817, 1.442695
        %v917 = vpow.pop %v916
        %v918 = vmul.f32 %v818, 1.442695
        %v919 = vpow.pop %v918
        %v920 = vmul.f32 %v819, 1.442695
        %v921 = vpow.pop %v920
        %v922 = vmul.f32 %v820, 1.442695
        %v923 = vpow.pop %v922
        %v924 = vmul.f32 %v821, 1.442695
        %v925 = vpow.pop %v924
        %v926 = vmul.f32 %v822, 1.442695
        %v927 = vpow.pop %v926
        %v928 = vmul.f32 %v823, 1.442695
        %v929 = vpow.pop %v928
        %v930 = vmul.f32 %v824, 1.442695
        %v931 = vpow.pop %v930
        %v932 = vmul.f32 %v825, 1.442695
        %v933 = vpow.pop %v932
        %v934 = vmul.f32 %v826, 1.442695
        %v935 = vpow.pop %v934
        %v936 = vmul.f32 %v827, 1.442695
        %v937 = vpow.pop %v936
        %v938 = vmul.f32 %v828, 1.442695
        %v939 = vpow.pop %v938
        %v940 = vmul.f32 %v829, 1.442695
        %v941 = vpow.pop %v940
        %v942 = vmul.f32 %v830, 1.442695
        %v943 = vpow.pop %v942
        %v944 = vmul.f32 %v831, 1.442695
        %v945 = vpow.pop %v944
        %v946 = vmul.f32 %v832, 1.442695
        %v947 = vpow.pop %v946
        %v948 = vmul.f32 %v833, 1.442695
        %v949 = vpow.pop %v948
        %v950 = vmul.f32 %v834, 1.442695
        %v951 = vpow.pop %v950
        %v952 = vmul.f32 %v835, 1.442695
        %v953 = vpow.pop %v952
        %v954 = vmul.f32 %v836, 1.442695
        %v955 = vpow.pop %v954
        %v956 = vmul.f32 %v837, 1.442695
        %v957 = vpow.pop %v956
        %v958 = vmul.f32 %v838, 1.442695
        %v959 = vpow.pop %v958
        %v960 = vmul.f32 %v839, 1.442695
        %v961 = vpow.pop %v960
        %v962 = vmul.f32 %v840, 1.442695
        %v963 = vpow.pop %v962
        %v964 = vmul.f32 %v841, 1.442695
        %v965 = vpow.pop %v964
        %v966 = vmul.f32 %v842, 1.442695
        %v967 = vpow.pop %v966
        %v968 = vmul.f32 %v843, 1.442695
        %v969 = vpow.pop %v968
        %v970 = vmul.f32 %v844, 1.442695
        %v971 = vpow.pop %v970
        %v972 = vmul.f32 %v845, 1.442695
        %v973 = vpow.pop %v972
        %v974 = vld [vmem:[#allocation3] sm:$0x3]
        %v975 = vmul.f32 %v770, %v974
        %v976 = vadd.f32 %v847, %v851
        %v977 = vadd.f32 %v976, %v855
        %v978 = vadd.f32 %v977, %v859
        %v979 = vadd.f32 %v978, %v863
        %v980 = vadd.f32 %v979, %v867
        %v981 = vadd.f32 %v980, %v871
        %v982 = vadd.f32 %v981, %v875
        %v983 = vadd.f32 %v982, %v879
        %v984 = vadd.f32 %v983, %v883
        %v985 = vadd.f32 %v984, %v887
        %v986 = vadd.f32 %v985, %v891
        %v987 = vadd.f32 %v986, %v895
        %v988 = vadd.f32 %v987, %v899
        %v989 = vadd.f32 %v988, %v903
        %v990 = vadd.f32 %v989, %v907
        %v991 = vadd.f32 %v990, %v911
        %v992 = vadd.f32 %v991, %v915
        %v993 = vadd.f32 %v992, %v919
        %v994 = vadd.f32 %v993, %v923
        %v995 = vadd.f32 %v994, %v927
        %v996 = vadd.f32 %v995, %v931
        %v997 = vadd.f32 %v996, %v935
        %v998 = vadd.f32 %v997, %v939
        %v999 = vadd.f32 %v998, %v943
        %v1000 = vadd.f32 %v999, %v947
        %v1001 = vadd.f32 %v1000, %v951
        %v1002 = vadd.f32 %v1001, %v955
        %v1003 = vadd.f32 %v1002, %v959
        %v1004 = vadd.f32 %v1003, %v963
        %v1005 = vadd.f32 %v1004, %v967
        %v1006 = vadd.f32 %v1005, %v971
        %v1007 = vrot.slane %v1006, 4
        %v1008 = vadd.f32 %v1006, %v1007
        %v1009 = vrot.slane %v1008, 2
        %v1010 = vadd.f32 %v1008, %v1009
        %v1011 = vrot.slane %v1010, 1
        %v1012 = vadd.f32 %v1010, %v1011
        %v1013 = vadd.f32 %v849, %v853
        %v1014 = vadd.f32 %v1013, %v857
        %v1015 = vadd.f32 %v1014, %v861
        %v1016 = vadd.f32 %v1015, %v865
        %v1017 = vadd.f32 %v1016, %v869
        %v1018 = vadd.f32 %v1017, %v873
        %v1019 = vadd.f32 %v1018, %v877
        %v1020 = vadd.f32 %v1019, %v881
        %v1021 = vadd.f32 %v1020, %v885
        %v1022 = vadd.f32 %v1021, %v889
        %v1023 = vadd.f32 %v1022, %v893
        %v1024 = vadd.f32 %v1023, %v897
        %v1025 = vadd.f32 %v1024, %v901
        %v1026 = vadd.f32 %v1025, %v905
        %v1027 = vadd.f32 %v1026, %v909
        %v1028 = vadd.f32 %v1027, %v913
        %v1029 = vadd.f32 %v1028, %v917
        %v1030 = vadd.f32 %v1029, %v921
        %v1031 = vadd.f32 %v1030, %v925
        %v1032 = vadd.f32 %v1031, %v929
        %v1033 = vadd.f32 %v1032, %v933
        %v1034 = vadd.f32 %v1033, %v937
        %v1035 = vadd.f32 %v1034, %v941
        %v1036 = vadd.f32 %v1035, %v945
        %v1037 = vadd.f32 %v1036, %v949
        %v1038 = vadd.f32 %v1037, %v953
        %v1039 = vadd.f32 %v1038, %v957
        %v1040 = vadd.f32 %v1039, %v961
        %v1041 = vadd.f32 %v1040, %v965
        %v1042 = vadd.f32 %v1041, %v969
        %v1043 = vadd.f32 %v1042, %v973
        %v1044 = vrot.slane %v1043, 4
        %v1045 = vadd.f32 %v1043, %v1044
        %v1046 = vrot.slane %v1045, 2
        %v1047 = vadd.f32 %v1045, %v1046
        %v1048 = vrot.slane %v1047, 1
        %v1049 = vadd.f32 %v1047, %v1048
        %v1052 = vcombine.low %v1012, %v1049
        %v1054 = vunpack.c.l.s4 1966171168
        %v1055 = vunpack.c.0.s8 %v1054
        %v1056 = vlaneseq
        %v1057 = vshrl.u32 %v1056, 7
        %v1058 = vsub.s32 %v1055, %v1057
        %v1059 = vrot.slane %v1052, %v1058
        %v1061 = vunpack.c.l.s4 1966171168
        %v1062 = vunpack.c.0.s8 %v1061
        %v1063 = vlaneseq
        %v1064 = vshrl.u32 %v1063, 7
        %v1065 = vsub.s32 %v1062, %v1064
        %v1066 = vrot.slane %v1059, %v1065
        %v1068 = vadd.f32 %v975, %v1066
        %v1069 = vlaneseq
        %vm1070 = vcmp.ge.s32.totalorder %v1069, 0
        %vm1071 = vcmp.lt.s32.totalorder %v1069, 256
        %vm1072 = vmand %vm1070, %vm1071
        %1073 = vst.msk [vmem:[#allocation3] sm:$0x3] %vm1072, %v1068
        %v1074 = vld [vmem:[#allocation4] sm:$0xff]
        %v1076 = vlaneseq
        %v1077 = vshrl.u32 %v1076, 7
        %v1078 = vsub.s32 0, %v1077
        %v1079 = vrot.slane %v770, %v1078
        %v1080 = vlaneseq
        %v1081 = vshrl.u32 %v1080, 7
        %v1082 = vsub.s32 1, %v1081
        %v1083 = vrot.slane %v770, %v1082
        %v1087 = vcombine.high %v1074, %v1074
        %v1089 = vmul.f32 %v1079, %v1074
        %v1090 = vmul.f32 %v1083, %v1087
        %v1091 = vld [vmem:[%s313] sm:$0xf]
        %v1092 = vpack.c.bf16 %v851, %v847
        %v1093 = vpack.c.bf16 %v853, %v849
        %v1094 = vpack.c.bf16 %v859, %v855
        %v1095 = vpack.c.bf16 %v861, %v857
        %v1096 = vpack.c.bf16 %v867, %v863
        %v1097 = vpack.c.bf16 %v869, %v865
        %v1098 = vpack.c.bf16 %v875, %v871
        %v1099 = vpack.c.bf16 %v877, %v873
        %v1100 = vpack.c.bf16 %v883, %v879
        %v1101 = vpack.c.bf16 %v885, %v881
        %v1102 = vpack.c.bf16 %v891, %v887
        %v1103 = vpack.c.bf16 %v893, %v889
        %v1104 = vpack.c.bf16 %v899, %v895
        %v1105 = vpack.c.bf16 %v901, %v897
        %v1106 = vpack.c.bf16 %v907, %v903
        %v1107 = vpack.c.bf16 %v909, %v905
        %v1108 = vpack.c.bf16 %v915, %v911
        %v1109 = vpack.c.bf16 %v917, %v913
        %v1110 = vpack.c.bf16 %v923, %v919
        %v1111 = vpack.c.bf16 %v925, %v921
        %v1112 = vpack.c.bf16 %v931, %v927
        %v1113 = vpack.c.bf16 %v933, %v929
        %v1114 = vpack.c.bf16 %v939, %v935
        %v1115 = vpack.c.bf16 %v941, %v937
        %v1116 = vpack.c.bf16 %v947, %v943
        %v1117 = vpack.c.bf16 %v949, %v945
        %v1118 = vpack.c.bf16 %v955, %v951
        %v1119 = vpack.c.bf16 %v957, %v953
        %v1120 = vpack.c.bf16 %v963, %v959
        %v1121 = vpack.c.bf16 %v965, %v961
        %v1122 = vpack.c.bf16 %v971, %v967
        %v1123 = vpack.c.bf16 %v973, %v969
        %v1126 = vunpack.c.l.s4 1983009808
        %v1127 = vunpack.c.0.s8 %v1126
        %v1128 = vlaneseq
        %v1129 = vshrl.u32 %v1128, 7
        %v1130 = vsub.s32 %v1127, %v1129
        %v1131 = vrot.slane %v1091, %v1130
        %v1132 = vcombine.high %v1131, %v1131
        %1135 = vmatprep.subr.bf16.mxu0 %v1093
        %1136 = vmatpush1.bf16.msra.mxu0 %v1092
        %1137 = vmatprep.subr.bf16.mxu0 %v1095
        %1138 = vmatpush1.bf16.msra.mxu0 %v1094
        %1139 = vmatprep.subr.bf16.mxu0 %v1097
        %1140 = vmatpush1.bf16.msra.mxu0 %v1096
        %1141 = vmatprep.subr.bf16.mxu0 %v1099
        %1142 = vmatpush1.bf16.msra.mxu0 %v1098
        %1143 = vmatprep.subr.bf16.mxu0 %v1101
        %1144 = vmatpush1.bf16.msra.mxu0 %v1100
        %1145 = vmatprep.subr.bf16.mxu0 %v1103
        %1146 = vmatpush1.bf16.msra.mxu0 %v1102
        %1147 = vmatprep.subr.bf16.mxu0 %v1105
        %1148 = vmatpush1.bf16.msra.mxu0 %v1104
        %1149 = vmatprep.subr.bf16.mxu0 %v1107
        %1150 = vmatpush1.bf16.msra.mxu0 %v1106
        %1151 = vmatprep.subr.bf16.mxu0 %v1109
        %1152 = vmatpush1.bf16.msra.mxu0 %v1108
        %1153 = vmatprep.subr.bf16.mxu0 %v1111
        %1154 = vmatpush1.bf16.msra.mxu0 %v1110
        %1155 = vmatprep.subr.bf16.mxu0 %v1113
        %1156 = vmatpush1.bf16.msra.mxu0 %v1112
        %1157 = vmatprep.subr.bf16.mxu0 %v1115
        %1158 = vmatpush1.bf16.msra.mxu0 %v1114
        %1159 = vmatprep.subr.bf16.mxu0 %v1117
        %1160 = vmatpush1.bf16.msra.mxu0 %v1116
        %1161 = vmatprep.subr.bf16.mxu0 %v1119
        %1162 = vmatpush1.bf16.msra.mxu0 %v1118
        %1163 = vmatprep.subr.bf16.mxu0 %v1121
        %1164 = vmatpush1.bf16.msra.mxu0 %v1120
        %1165 = vmatprep.subr.bf16.mxu0 %v1123
        %1166 = vmatpush1.bf16.msra.mxu0 %v1122
        %1167 = vmatprep.mubr.bf16.mxu0 %v1132
        %1168 = vmatmul.mubr.bf16.gmra.mrb[0].mxu0 %v1131
        %v1169 = vpop.f32.mrb[0].mxu0
        %v1170 = vadd.f32 0.0, %v1169
        %v1171 = vpop.f32.mrb[0].mxu0
        %v1172 = vadd.f32 0.0, %v1171
        %v1173 = vpop.f32.mrb[0].mxu0
        %v1174 = vpop.f32.mrb[0].mxu0
        %1175 = vdwg.mxu0
        %v1176 = vadd.f32 %v1089, %v1170
        %v1177 = vadd.f32 %v1090, %v1172
        %v1180 = vcombine.low %v1176, %v1177
        %1182 = vst [vmem:[#allocation4] sm:$0xff] %v1180
        %1183 = vst.msk [vmem:[#allocation2] sm:$0x3] %vm1072, %v767
        // Predicated region
        $region57: #{tpu_custom_call.1} parent=35 // pred_check
          %p1184 = pneg %p368
        $region58: #{tpu_custom_call.1} parent=35 // pred_check_branch
          %1186 = sbr.rel (%p1184) target = $region60
        $region59: #{tpu_custom_call.1} parent=35 // pred_region
          %v1187 = vld [vmem:[#allocation3] sm:$0x3]
          %v1188 = vrcp.pop %v1187
          %v1189 = vld [vmem:[#allocation4] sm:$0xff]
          %v1191 = vlaneseq
          %v1192 = vshrl.u32 %v1191, 7
          %v1193 = vsub.s32 0, %v1192
          %v1194 = vrot.slane %v1188, %v1193
          %v1195 = vlaneseq
          %v1196 = vshrl.u32 %v1195, 7
          %v1197 = vsub.s32 1, %v1196
          %v1198 = vrot.slane %v1188, %v1197
          %v1199 = vcombine.low %v1194, %v1198
          %v1201 = vmul.f32 %v1189, %v1199
          %v1202 = vld [vmem:[%s322] sm:$0xff]
          %v1203 = vadd.f32 %v1201, %v1202
          %1204 = vst [vmem:[%s361] sm:$0xff] %v1203
        $region60: #{tpu_custom_call.1} parent=35 // pred_fallthru
          _
        %s1205 = sand.u32 %s168, 1
        %s1206 = scalar_lea.sflag [#allocation7], %s1205
        %s1207 = sand.u32 %s168, 1
        %s1208 = smul.addr %s1207, 8
        %s1209 = scalar_lea.vmem [#allocation13], %s1208
        // Predicated region
        $region61: #{tpu_custom_call.1} parent=35 // pred_check
          %p1210 = pneg %p178
        $region62: #{tpu_custom_call.1} parent=35 // pred_check_branch
          %1212 = sbr.rel (%p1210) target = $region64
        $region63: #{tpu_custom_call.1} parent=35 // pred_region
          %s1213 = smul.u32 2, %s33
          %s1215 = ssub.s32 128, 128
          %1216 = vsyncadd %s1206, %s1215
          %s1217 = smul.addr %s32, 2
          %s1218 = sadd.s32 %s1213, %s1217
          %s1219 = smul.addr %s1218, 64
          %s1220 = scalar_lea.hbm %s4, %s1219
          %s1222 = sshll.u32 %s1209, 4
          %s1223 = int_to_ptr.vmem [resolvable:$true] %s1222
          %1225 = dma.vmem_to_hbm [thread:$0]  %s1223, 128, %s1220, %s1206
        $region64: #{tpu_custom_call.1} parent=35 // pred_fallthru
          _
      $region36: #{tpu_custom_call.1} parent=5 // pred_fallthru
        _
      %p1226 = scmp.le.s32.totalorder 2, %s22
      // Predicated region
      $region65: #{tpu_custom_call.1} parent=5 // pred_check
        %p1227 = pneg %p1226
      $region66: #{tpu_custom_call.1} parent=5 // pred_check_branch
        %1229 = sbr.rel (%p1227) target = $region68
      $region67: #{tpu_custom_call.1} parent=5 // pred_region
        %s1230 = ssub.s32 %s22, 2
        // Predicated region
        $region69: #{tpu_custom_call.1} parent=67 // pred_check
          %p1231 = pneg %p184
        $region70: #{tpu_custom_call.1} parent=67 // pred_check_branch
          %1233 = sbr.rel (%p1231) target = $region72
        $region71: #{tpu_custom_call.1} parent=67 // pred_region
          %s1234 = sand.u32 %s169, 1
          %s1235 = scalar_lea.sflag [#allocation7], %s1234
          %s1236 = sand.u32 %s169, 1
          %s1237 = smul.addr %s1236, 8
          %s1238 = scalar_lea.vmem [#allocation13], %s1237
          %1239 = dma.done %s1235, 128
        $region72: #{tpu_custom_call.1} parent=67 // pred_fallthru
          _
      $region68: #{tpu_custom_call.1} parent=5 // pred_fallthru
        _
    $region6: #{tpu_custom_call.1} parent=1 // loop_footer
      %s26 = sadd.s32 1, %s22
    $region7: #{tpu_custom_call.1} parent=1 // loop_footer_branch
      %21 = sbr.rel target = $region3
    $region8: #{tpu_custom_call.1} parent=1 // loop_exit
      _
    %1240 = vsyncpa [#allocation6], 1
    %s1241 = scalar_lea.sflag [#allocation6], 1
    %1242 = vsyncpa %s1241, 1
    %1243 = vsyncpa [#allocation9], 1
    %s1244 = scalar_lea.sflag [#allocation9], 1
    %1245 = vsyncpa %s1244, 1
    %1246 = vsyncpa [#allocation12], 1
    %s1247 = scalar_lea.sflag [#allocation12], 1
    %1248 = vsyncpa %s1247, 1
    %1249 = vsyncpa [#allocation7], 1
    %s1250 = scalar_lea.sflag [#allocation7], 1
    %1251 = vsyncpa %s1250, 1

</llo_original>
